<compile_context>
chip_gen: v7x
topology: tpu7x:2x2x1
jax: 0.10.0
libtpu: 0.0.40
codegen_flags: <defaults>
</compile_context>

<pallas_src>
import jax
import jax.numpy as jnp
from jax.experimental import pallas as pl
from jax.experimental.pallas import tpu as pltpu

_BN_EPS = 1e-5
_LANES = 128


# ----------------------------- kernel ---------------------------------------

def _bn_normalize(h, eps=_BN_EPS):
    """Training-mode BatchNorm1d normalization (affine folded into next Linear).

    Single-pass stats: sum(h) and sum(h*h) are independent, so the two
    cross-sublane (XLU) reductions can overlap instead of serializing.
    """
    mu = jnp.mean(h, axis=0, keepdims=True)
    var = jnp.mean(h * h, axis=0, keepdims=True) - mu * mu
    var = jnp.maximum(var, 0.0)  # guard against tiny negatives from cancellation
    return (h - mu) * jax.lax.rsqrt(var + eps)


def actor_kernel(x_ref, w1_ref, w2_ref, w3_ref, b_ref, o_ref):
    x = x_ref[...].astype(jnp.float32)
    bias = b_ref[...]                       # (8, 128) slab; rows 0..2 used

    n1 = w1_ref.shape[1]
    n2 = w2_ref.shape[1]
    n3 = w3_ref.shape[1]

    # BN -> Linear(+folded affine) -> ReLU
    h = _bn_normalize(x)
    h = jnp.dot(h, w1_ref[...], preferred_element_type=jnp.float32) + bias[0:1, :n1]
    h = jnp.maximum(h, 0.0)

    # BN -> Linear(+folded affine) -> ReLU
    h = _bn_normalize(h)
    h = jnp.dot(h, w2_ref[...], preferred_element_type=jnp.float32) + bias[1:2, :n2]
    h = jnp.maximum(h, 0.0)

    # BN -> Linear(+folded affine) -> Tanh
    h = _bn_normalize(h)
    h = jnp.dot(h, w3_ref[...], preferred_element_type=jnp.float32) + bias[2:3, :n3]
    o_ref[...] = jnp.tanh(h).astype(o_ref.dtype)


@jax.jit
def actor_forward(x, folded):
    batch = x.shape[0]
    action_size = folded["w3"].shape[1]
    vmem = pl.BlockSpec(memory_space=pltpu.MemorySpace.VMEM)
    args = (x, folded["w1"], folded["w2"], folded["w3"], folded["bias"])
    return pl.pallas_call(
        actor_kernel,
        out_shape=jax.ShapeDtypeStruct((batch, action_size), jnp.float32),
        in_specs=[vmem] * len(args),
        out_specs=vmem,
    )(*args)


# ----------------------- parameter init & prep ------------------------------

def xavier_uniform(key, fan_in, fan_out):
    bound = jnp.sqrt(6.0 / (fan_in + fan_out))
    # stored as (in, out) so the kernel does x @ W  (== torch's x @ W.T)
    return jax.random.uniform(key, (fan_in, fan_out), jnp.float32, -bound, bound)


def init_actor_params(key, state_size, action_size, nodes=(64, 64)):
    """Matches the PyTorch module: BN affine = (1, 0); Linear = Xavier, bias 0.1."""
    k1, k2, k3 = jax.random.split(key, 3)
    dims = [state_size, nodes[0], nodes[1], action_size]
    p = {}
    for i, d in enumerate(dims[:3], start=1):
        p[f"g{i}"] = jnp.ones((1, d), jnp.float32)
        p[f"bt{i}"] = jnp.zeros((1, d), jnp.float32)
    for i, (kk, (fi, fo)) in enumerate(
            zip((k1, k2, k3), zip(dims[:-1], dims[1:])), start=1):
        p[f"w{i}"] = xavier_uniform(kk, fi, fo)
        p[f"b{i}"] = jnp.full((1, fo), 0.1, jnp.float32)
    return p


def _fold_bn_into_linear(gamma, beta, w, b):
    # BN affine then Linear:  (h_norm*gamma + beta) @ W + b
    #                      ==  h_norm @ (gamma^T * W) + (beta @ W + b)
    w_f = w * gamma.reshape(-1, 1)
    b_f = beta @ w + b
    return w_f, b_f


def prepare_actor_params(p):
    """One-time prep: fold BN affine into the Linears and pack biases into a slab."""
    w1, b1 = _fold_bn_into_linear(p["g1"], p["bt1"], p["w1"], p["b1"])
    w2, b2 = _fold_bn_into_linear(p["g2"], p["bt2"], p["w2"], p["b2"])
    w3, b3 = _fold_bn_into_linear(p["g3"], p["bt3"], p["w3"], p["b3"])
    slab = jnp.zeros((8, _LANES), jnp.float32)
    slab = slab.at[0, : b1.shape[1]].set(b1[0])
    slab = slab.at[1, : b2.shape[1]].set(b2[0])
    slab = slab.at[2, : b3.shape[1]].set(b3[0])
    return {"w1": w1, "w2": w2, "w3": w3, "bias": slab}


# ----------------------------- reference ------------------------------------

def _bn_ref(h, gamma, beta, eps=_BN_EPS):
    mu = jnp.mean(h, axis=0, keepdims=True)
    var = jnp.mean((h - mu) * (h - mu), axis=0, keepdims=True)
    return (h - mu) * jax.lax.rsqrt(var + eps) * gamma + beta


def actor_reference(x, p):
    h = _bn_ref(x, p["g1"], p["bt1"])
    h = jnp.maximum(h @ p["w1"] + p["b1"], 0.0)
    h = _bn_ref(h, p["g2"], p["bt2"])
    h = jnp.maximum(h @ p["w2"] + p["b2"], 0.0)
    h = _bn_ref(h, p["g3"], p["bt3"])
    return jnp.tanh(h @ p["w3"] + p["b3"])


# ------------------------------- main ----------------------------------------

if __name__ == "__main__":
    state_size, action_size, batch = 16, 4, 8
    key = jax.random.PRNGKey(0)
    kx, kp = jax.random.split(key)
    x = jax.random.normal(kx, (batch, state_size), jnp.float32)

    params = init_actor_params(kp, state_size, action_size, nodes=(64, 64))
    folded = prepare_actor_params(params)

    out = actor_forward(x, folded)
    jax.block_until_ready(out)

    ref = actor_reference(x, params)
    assert out.shape == (batch, action_size)
    assert jnp.allclose(out, ref, atol=1e-5, rtol=1e-5), "mismatch vs reference"

    print("KERNEL_OK")
</pallas_src>

<mosaic_0001>
module attributes {stable_mosaic.version = 11 : i64} {
  func.func @actor_kernel(%arg0: memref<8x16xf32, #tpu.memory_space<vmem>>, %arg1: memref<16x64xf32, #tpu.memory_space<vmem>>, %arg2: memref<64x64xf32, #tpu.memory_space<vmem>>, %arg3: memref<64x4xf32, #tpu.memory_space<vmem>>, %arg4: memref<8x128xf32, #tpu.memory_space<vmem>>, %arg5: memref<8x4xf32, #tpu.memory_space<vmem>>) attributes {dimension_semantics = [], scalar_prefetch = 0 : i64, scratch_operands = 0 : i64, tpu.core_type = #tpu.core_type<tc>} {
    %c0 = arith.constant 0 : index
    %c0_0 = arith.constant 0 : index
    %0 = vector.load %arg0[%c0, %c0_0] : memref<8x16xf32, #tpu.memory_space<vmem>>, vector<8x16xf32>
    %c0_1 = arith.constant 0 : index
    %c0_2 = arith.constant 0 : index
    %1 = vector.load %arg4[%c0_1, %c0_2] : memref<8x128xf32, #tpu.memory_space<vmem>>, vector<8x128xf32>
    %cst = arith.constant dense<0.000000e+00> : vector<16xf32>
    %2 = vector.multi_reduction <add>, %0, %cst [0] : vector<8x16xf32> to vector<16xf32>
    %3 = vector.shape_cast %2 : vector<16xf32> to vector<1x16xf32>
    %cst_3 = arith.constant 8.000000e+00 : f32
    %4 = vector.broadcast %cst_3 : f32 to vector<1x16xf32>
    %5 = arith.divf %3, %4 : vector<1x16xf32>
    %6 = arith.mulf %0, %0 : vector<8x16xf32>
    %cst_4 = arith.constant dense<0.000000e+00> : vector<16xf32>
    %7 = vector.multi_reduction <add>, %6, %cst_4 [0] : vector<8x16xf32> to vector<16xf32>
    %8 = vector.shape_cast %7 : vector<16xf32> to vector<1x16xf32>
    %cst_5 = arith.constant 8.000000e+00 : f32
    %9 = vector.broadcast %cst_5 : f32 to vector<1x16xf32>
    %10 = arith.divf %8, %9 : vector<1x16xf32>
    %11 = arith.mulf %5, %5 : vector<1x16xf32>
    %12 = arith.subf %10, %11 : vector<1x16xf32>
    %cst_6 = arith.constant 0.000000e+00 : f32
    %13 = vector.broadcast %cst_6 : f32 to vector<1x16xf32>
    %14 = arith.maximumf %12, %13 : vector<1x16xf32>
    %15 = vector.broadcast %5 : vector<1x16xf32> to vector<8x16xf32>
    %16 = arith.subf %0, %15 : vector<8x16xf32>
    %cst_7 = arith.constant 9.99999974E-6 : f32
    %17 = vector.broadcast %cst_7 : f32 to vector<1x16xf32>
    %18 = arith.addf %14, %17 : vector<1x16xf32>
    %19 = math.rsqrt %18 : vector<1x16xf32>
    %20 = vector.broadcast %19 : vector<1x16xf32> to vector<8x16xf32>
    %21 = arith.mulf %16, %20 : vector<8x16xf32>
    %c0_8 = arith.constant 0 : index
    %c0_9 = arith.constant 0 : index
    %22 = vector.load %arg1[%c0_8, %c0_9] : memref<16x64xf32, #tpu.memory_space<vmem>>, vector<16x64xf32>
    %cst_10 = arith.constant dense<0.000000e+00> : vector<8x64xf32>
    %23 = tpu.matmul %21, %22, %cst_10 {dimension_numbers = #tpu.dot_dimension_numbers<[1], [0], [0], [1], [0, 0, 1, 1], [], []>} : vector<8x16xf32>, vector<16x64xf32>, vector<8x64xf32> -> vector<8x64xf32>
    %24 = vector.extract_strided_slice %1 {offsets = [0, 0], sizes = [1, 64], strides = [1, 1]} : vector<8x128xf32> to vector<1x64xf32>
    %25 = vector.broadcast %24 : vector<1x64xf32> to vector<8x64xf32>
    %26 = arith.addf %23, %25 : vector<8x64xf32>
    %cst_11 = arith.constant 0.000000e+00 : f32
    %27 = vector.broadcast %cst_11 : f32 to vector<8x64xf32>
    %28 = arith.maximumf %26, %27 : vector<8x64xf32>
    %cst_12 = arith.constant dense<0.000000e+00> : vector<64xf32>
    %29 = vector.multi_reduction <add>, %28, %cst_12 [0] : vector<8x64xf32> to vector<64xf32>
    %30 = vector.shape_cast %29 : vector<64xf32> to vector<1x64xf32>
    %cst_13 = arith.constant 8.000000e+00 : f32
    %31 = vector.broadcast %cst_13 : f32 to vector<1x64xf32>
    %32 = arith.divf %30, %31 : vector<1x64xf32>
    %33 = arith.mulf %28, %28 : vector<8x64xf32>
    %cst_14 = arith.constant dense<0.000000e+00> : vector<64xf32>
    %34 = vector.multi_reduction <add>, %33, %cst_14 [0] : vector<8x64xf32> to vector<64xf32>
    %35 = vector.shape_cast %34 : vector<64xf32> to vector<1x64xf32>
    %cst_15 = arith.constant 8.000000e+00 : f32
    %36 = vector.broadcast %cst_15 : f32 to vector<1x64xf32>
    %37 = arith.divf %35, %36 : vector<1x64xf32>
    %38 = arith.mulf %32, %32 : vector<1x64xf32>
    %39 = arith.subf %37, %38 : vector<1x64xf32>
    %cst_16 = arith.constant 0.000000e+00 : f32
    %40 = vector.broadcast %cst_16 : f32 to vector<1x64xf32>
    %41 = arith.maximumf %39, %40 : vector<1x64xf32>
    %42 = vector.broadcast %32 : vector<1x64xf32> to vector<8x64xf32>
    %43 = arith.subf %28, %42 : vector<8x64xf32>
    %cst_17 = arith.constant 9.99999974E-6 : f32
    %44 = vector.broadcast %cst_17 : f32 to vector<1x64xf32>
    %45 = arith.addf %41, %44 : vector<1x64xf32>
    %46 = math.rsqrt %45 : vector<1x64xf32>
    %47 = vector.broadcast %46 : vector<1x64xf32> to vector<8x64xf32>
    %48 = arith.mulf %43, %47 : vector<8x64xf32>
    %c0_18 = arith.constant 0 : index
    %c0_19 = arith.constant 0 : index
    %49 = vector.load %arg2[%c0_18, %c0_19] : memref<64x64xf32, #tpu.memory_space<vmem>>, vector<64x64xf32>
    %cst_20 = arith.constant dense<0.000000e+00> : vector<8x64xf32>
    %50 = tpu.matmul %48, %49, %cst_20 {dimension_numbers = #tpu.dot_dimension_numbers<[1], [0], [0], [1], [0, 0, 1, 1], [], []>} : vector<8x64xf32>, vector<64x64xf32>, vector<8x64xf32> -> vector<8x64xf32>
    %51 = vector.extract_strided_slice %1 {offsets = [1, 0], sizes = [1, 64], strides = [1, 1]} : vector<8x128xf32> to vector<1x64xf32>
    %52 = vector.broadcast %51 : vector<1x64xf32> to vector<8x64xf32>
    %53 = arith.addf %50, %52 : vector<8x64xf32>
    %cst_21 = arith.constant 0.000000e+00 : f32
    %54 = vector.broadcast %cst_21 : f32 to vector<8x64xf32>
    %55 = arith.maximumf %53, %54 : vector<8x64xf32>
    %cst_22 = arith.constant dense<0.000000e+00> : vector<64xf32>
    %56 = vector.multi_reduction <add>, %55, %cst_22 [0] : vector<8x64xf32> to vector<64xf32>
    %57 = vector.shape_cast %56 : vector<64xf32> to vector<1x64xf32>
    %cst_23 = arith.constant 8.000000e+00 : f32
    %58 = vector.broadcast %cst_23 : f32 to vector<1x64xf32>
    %59 = arith.divf %57, %58 : vector<1x64xf32>
    %60 = arith.mulf %55, %55 : vector<8x64xf32>
    %cst_24 = arith.constant dense<0.000000e+00> : vector<64xf32>
    %61 = vector.multi_reduction <add>, %60, %cst_24 [0] : vector<8x64xf32> to vector<64xf32>
    %62 = vector.shape_cast %61 : vector<64xf32> to vector<1x64xf32>
    %cst_25 = arith.constant 8.000000e+00 : f32
    %63 = vector.broadcast %cst_25 : f32 to vector<1x64xf32>
    %64 = arith.divf %62, %63 : vector<1x64xf32>
    %65 = arith.mulf %59, %59 : vector<1x64xf32>
    %66 = arith.subf %64, %65 : vector<1x64xf32>
    %cst_26 = arith.constant 0.000000e+00 : f32
    %67 = vector.broadcast %cst_26 : f32 to vector<1x64xf32>
    %68 = arith.maximumf %66, %67 : vector<1x64xf32>
    %69 = vector.broadcast %59 : vector<1x64xf32> to vector<8x64xf32>
    %70 = arith.subf %55, %69 : vector<8x64xf32>
    %cst_27 = arith.constant 9.99999974E-6 : f32
    %71 = vector.broadcast %cst_27 : f32 to vector<1x64xf32>
    %72 = arith.addf %68, %71 : vector<1x64xf32>
    %73 = math.rsqrt %72 : vector<1x64xf32>
    %74 = vector.broadcast %73 : vector<1x64xf32> to vector<8x64xf32>
    %75 = arith.mulf %70, %74 : vector<8x64xf32>
    %c0_28 = arith.constant 0 : index
    %c0_29 = arith.constant 0 : index
    %76 = vector.load %arg3[%c0_28, %c0_29] : memref<64x4xf32, #tpu.memory_space<vmem>>, vector<64x4xf32>
    %cst_30 = arith.constant dense<0.000000e+00> : vector<8x4xf32>
    %77 = tpu.matmul %75, %76, %cst_30 {dimension_numbers = #tpu.dot_dimension_numbers<[1], [0], [0], [1], [0, 0, 1, 1], [], []>} : vector<8x64xf32>, vector<64x4xf32>, vector<8x4xf32> -> vector<8x4xf32>
    %78 = vector.extract_strided_slice %1 {offsets = [2, 0], sizes = [1, 4], strides = [1, 1]} : vector<8x128xf32> to vector<1x4xf32>
    %79 = vector.broadcast %78 : vector<1x4xf32> to vector<8x4xf32>
    %80 = arith.addf %77, %79 : vector<8x4xf32>
    %81 = math.tanh %80 : vector<8x4xf32>
    %c0_31 = arith.constant 0 : index
    %c0_32 = arith.constant 0 : index
    %82 = vector.load %arg5[%c0_31, %c0_32] : memref<8x4xf32, #tpu.memory_space<vmem>>, vector<8x4xf32>
    tpu.vector_store %arg5[%c0_31, %c0_32], %81 {strides = array<i32>} : memref<8x4xf32, #tpu.memory_space<vmem>>, vector<8x4xf32>,
    return
  }
}

</mosaic_0001>

<llo_original>
// kernel: actor_forward.1
$region0: #{actor_forward.1}
  #allocation0 [shape = 'u32[]', space=smem, size = 0x4, offset = 0x4, fixed_abs, tag = 'smem constant byte address 0x4 - core index']
  #allocation1 [shape = 'u32[144,128]{1,0:T(1,128)}', space=vmem, size = 0x12000, scoped, tag = 'internal scratch']
  %s0 = inlined_call_operand.vmem [shape: f32[8,16], index: 0, kind: input, shape index: {}]
  %s1 = inlined_call_operand.hbm [shape: f32[16,64], index: 1, kind: input, shape index: {}]
  %s2 = inlined_call_operand.vmem [shape: f32[64,64], index: 2, kind: input, shape index: {}]
  %s3 = inlined_call_operand.vmem [shape: f32[64,4], index: 3, kind: input, shape index: {}]
  %s4 = inlined_call_operand.hbm [shape: f32[8,128], index: 4, kind: input, shape index: {}]
  %s5 = inlined_call_operand.vmem [shape: f32[8,4], index: 5, kind: output, shape index: {}]
  %s6 = sld [smem:[#allocation0]]
  $region38: #{actor_forward.1} parent=0
    _
  %s8 = ssub.s32 1, %s6
  %s9 = scalar_select 0, %s8, %s6
  $region1: #{actor_forward.1} parent=0
    #allocation2 [shape = 'u8[8192]{0}', space=vmem, size = 0x2000, scoped, tag = 'input window, operand 1, single buffered']
    #allocation3 [shape = 's32[1]{0}', space=sflag, size = 0x4, scoped, tag = 'scoped memory for actor_forward.1']
    #allocation4 [shape = 'u8[4096]{0}', space=vmem, size = 0x1000, scoped, tag = 'input window, operand 4, single buffered']
    #allocation5 [shape = 's32[1]{0}', space=sflag, size = 0x4, scoped, tag = 'scoped memory for actor_forward.1']
    %10 = vsyncpa [#allocation3], 0
    %11 = vsyncpa [#allocation5], 0
    // Predicated region
    $region2: #{actor_forward.1} parent=1 // pred_check
      _
    $region3: #{actor_forward.1} parent=1 // pred_check_branch
      %13 = sbr.rel (0) target = $region5
    $region4: #{actor_forward.1} parent=1 // pred_region
      _
    $region5: #{actor_forward.1} parent=1 // pred_fallthru
      _
    // Predicated region
    $region6: #{actor_forward.1} parent=1 // pred_check
      _
    $region7: #{actor_forward.1} parent=1 // pred_check_branch
      %15 = sbr.rel (0) target = $region9
    $region8: #{actor_forward.1} parent=1 // pred_region
      %s17 = ssub.s32 256, 256
      %18 = vsyncadd [#allocation3], %s17
      %s19 = sshll.u32 [#allocation2], 4
      %s20 = int_to_ptr.vmem [resolvable:$true] %s19
      %25 = dma.hbm_to_vmem [thread:$0]  %s1, 256, %s20, [#allocation3], 128, 128, 8
    $region9: #{actor_forward.1} parent=1 // pred_fallthru
      _
    // Predicated region
    $region10: #{actor_forward.1} parent=1 // pred_check
      _
    $region11: #{actor_forward.1} parent=1 // pred_check_branch
      %27 = sbr.rel (0) target = $region13
    $region12: #{actor_forward.1} parent=1 // pred_region
      _
    $region13: #{actor_forward.1} parent=1 // pred_fallthru
      _
    // Predicated region
    $region14: #{actor_forward.1} parent=1 // pred_check
      _
    $region15: #{actor_forward.1} parent=1 // pred_check_branch
      %29 = sbr.rel (0) target = $region17
    $region16: #{actor_forward.1} parent=1 // pred_region
      _
    $region17: #{actor_forward.1} parent=1 // pred_fallthru
      _
    // Predicated region
    $region18: #{actor_forward.1} parent=1 // pred_check
      _
    $region19: #{actor_forward.1} parent=1 // pred_check_branch
      %31 = sbr.rel (0) target = $region21
    $region20: #{actor_forward.1} parent=1 // pred_region
      %s33 = ssub.s32 128, 128
      %34 = vsyncadd [#allocation5], %s33
      %s36 = sshll.u32 [#allocation4], 4
      %s37 = int_to_ptr.vmem [resolvable:$true] %s36
      %39 = dma.hbm_to_vmem [thread:$0]  %s4, 128, %s37, [#allocation5]
    $region21: #{actor_forward.1} parent=1 // pred_fallthru
      _
    // Predicated region
    $region22: #{actor_forward.1} parent=1 // pred_check
      _
    $region23: #{actor_forward.1} parent=1 // pred_check_branch
      %41 = sbr.rel (0) target = $region25
    $region24: #{actor_forward.1} parent=1 // pred_region
      %42 = dma.done [#allocation3], 256
    $region25: #{actor_forward.1} parent=1 // pred_fallthru
      _
    // Predicated region
    $region26: #{actor_forward.1} parent=1 // pred_check
      _
    $region27: #{actor_forward.1} parent=1 // pred_check_branch
      %44 = sbr.rel (0) target = $region29
    $region28: #{actor_forward.1} parent=1 // pred_region
      %45 = dma.done [#allocation5], 128
    $region29: #{actor_forward.1} parent=1 // pred_fallthru
      _
    %v46 = vld [vmem:[%s0] sm:$0xff]
    %v47 = vld [vmem:[#allocation4] sm:$0xff]
    %vm48 = vcmask 130048
    %v49 = vsel %vm48, %v46, 0.0
    %v50 = vrot.slane %v49, 4
    %v51 = vadd.f32 %v49, %v50
    %v52 = vrot.slane %v51, 2
    %v53 = vadd.f32 %v51, %v52
    %v54 = vrot.slane %v53, 1
    %v55 = vadd.f32 %v53, %v54
    %v56 = vrcp.pop 8.0
    %v57 = vmul.f32 %v55, %v56
    %v58 = vmul.f32 %v46, %v46
    %v59 = vsel %vm48, %v58, 0.0
    %v60 = vrot.slane %v59, 4
    %v61 = vadd.f32 %v59, %v60
    %v62 = vrot.slane %v61, 2
    %v63 = vadd.f32 %v61, %v62
    %v64 = vrot.slane %v63, 1
    %v65 = vadd.f32 %v63, %v64
    %v66 = vmul.f32 %v65, %v56
    %v67 = vmul.f32 %v57, %v57
    %v68 = vsub.f32 %v66, %v67
    %v69 = vmax.f32 %v68, 0.0
    %v70 = vsub.f32 %v46, %v57
    %v71 = vadd.f32 %v69, 1e-05
    %v72 = vrsqrt.pop %v71
    %v73 = vmul.f32 %v70, %v72
    %v74 = vld [vmem:[#allocation2] sm:$0xff]
    %v75 = vld [vmem:[#allocation2 + $0x8] sm:$0xff]
    %v76 = vlaneseq
    %v77 = vshrl.u32 %v76, 7
    %v78 = vsub.s32 0, %v77
    %v79 = vrot.slane %v47, %v78
    %v81 = vsel %vm48, %v73, 0
    %83 = vmatprep.subr.mxu0 0.0
    %84 = vmatpush1.msra.mxu0 %v74
    %85 = vmatprep.subr.mxu0 0.0
    %86 = vmatpush1.msra.mxu0 %v75
    %87 = vmatprep.subr.mxu0 0.0
    %88 = vmatpush1.msra.mxu0 0.0
    %89 = vmatprep.subr.mxu0 0.0
    %90 = vmatpush1.msra.mxu0 0.0
    %91 = vmatprep.subr.mxu0 0.0
    %92 = vmatpush1.msra.mxu0 0.0
    %93 = vmatprep.subr.mxu0 0.0
    %94 = vmatpush1.msra.mxu0 0.0
    %95 = vmatprep.subr.mxu0 0.0
    %96 = vmatpush1.msra.mxu0 0.0
    %97 = vmatprep.subr.mxu0 0.0
    %98 = vmatpush1.msra.mxu0 0.0
    %99 = vmatprep.subr.mxu0 0.0
    %100 = vmatpush1.msra.mxu0 0.0
    %101 = vmatprep.subr.mxu0 0.0
    %102 = vmatpush1.msra.mxu0 0.0
    %103 = vmatprep.subr.mxu0 0.0
    %104 = vmatpush1.msra.mxu0 0.0
    %105 = vmatprep.subr.mxu0 0.0
    %106 = vmatpush1.msra.mxu0 0.0
    %107 = vmatprep.subr.mxu0 0.0
    %108 = vmatpush1.msra.mxu0 0.0
    %109 = vmatprep.subr.mxu0 0.0
    %110 = vmatpush1.msra.mxu0 0.0
    %111 = vmatprep.subr.mxu0 0.0
    %112 = vmatpush1.msra.mxu0 0.0
    %113 = vmatprep.subr.mxu0 0.0
    %114 = vmatpush1.msra.mxu0 0.0
    %115 = vmatprep.subr.mxu0 0.0
    %116 = vmatpush1.msra.mxu0 0.0
    %117 = vmatprep.subr.mxu0 0.0
    %118 = vmatpush1.msra.mxu0 0.0
    %119 = vmatprep.subr.mxu0 0.0
    %120 = vmatpush1.msra.mxu0 0.0
    %121 = vmatprep.subr.mxu0 0.0
    %122 = vmatpush1.msra.mxu0 0.0
    %123 = vmatprep.subr.mxu0 0.0
    %124 = vmatpush1.msra.mxu0 0.0
    %125 = vmatprep.subr.mxu0 0.0
    %126 = vmatpush1.msra.mxu0 0.0
    %127 = vmatprep.subr.mxu0 0.0
    %128 = vmatpush1.msra.mxu0 0.0
    %129 = vmatprep.subr.mxu0 0.0
    %130 = vmatpush1.msra.mxu0 0.0
    %131 = vmatprep.subr.mxu0 0.0
    %132 = vmatpush1.msra.mxu0 0.0
    %133 = vmatprep.subr.mxu0 0.0
    %134 = vmatpush1.msra.mxu0 0.0
    %135 = vmatprep.subr.mxu0 0.0
    %136 = vmatpush1.msra.mxu0 0.0
    %137 = vmatprep.subr.mxu0 0.0
    %138 = vmatpush1.msra.mxu0 0.0
    %139 = vmatprep.subr.mxu0 0.0
    %140 = vmatpush1.msra.mxu0 0.0
    %141 = vmatprep.subr.mxu0 0.0
    %142 = vmatpush1.msra.mxu0 0.0
    %143 = vmatprep.subr.mxu0 0.0
    %144 = vmatpush1.msra.mxu0 0.0
    %145 = vmatprep.subr.mxu0 0.0
    %146 = vmatpush1.msra.mxu0 0.0
    %147 = vmatprep.mubr.f32.mxu0 0.0
    %148 = vmatmul.mubr.f32.gmra.mrb[0].mxu0 %v81
    %v149 = vpop.f32.mrb[0].mxu0
    %v150 = vadd.f32 %v79, %v149
    %v151 = vpop.f32.mrb[0].mxu0
    %152 = vdwg.mxu0
    %v153 = vmax.f32 %v150, 0.0
    %vm154 = vcmask 523264
    %v155 = vsel %vm154, %v153, 0.0
    %v156 = vrot.slane %v155, 4
    %v157 = vadd.f32 %v155, %v156
    %v158 = vrot.slane %v157, 2
    %v159 = vadd.f32 %v157, %v158
    %v160 = vrot.slane %v159, 1
    %v161 = vadd.f32 %v159, %v160
    %v162 = vmul.f32 %v161, %v56
    %v163 = vmul.f32 %v153, %v153
    %v164 = vsel %vm154, %v163, 0.0
    %v165 = vrot.slane %v164, 4
    %v166 = vadd.f32 %v164, %v165
    %v167 = vrot.slane %v166, 2
    %v168 = vadd.f32 %v166, %v167
    %v169 = vrot.slane %v168, 1
    %v170 = vadd.f32 %v168, %v169
    %v171 = vmul.f32 %v170, %v56
    %v172 = vmul.f32 %v162, %v162
    %v173 = vsub.f32 %v171, %v172
    %v174 = vmax.f32 %v173, 0.0
    %v175 = vsub.f32 %v153, %v162
    %v176 = vadd.f32 %v174, 1e-05
    %v177 = vrsqrt.pop %v176
    %v178 = vmul.f32 %v175, %v177
    %v179 = vld [vmem:[%s2] sm:$0xff]
    %v180 = vld [vmem:[%s2 + $0x8] sm:$0xff]
    %v181 = vld [vmem:[%s2 + $0x10] sm:$0xff]
    %v182 = vld [vmem:[%s2 + $0x18] sm:$0xff]
    %v183 = vld [vmem:[%s2 + $0x20] sm:$0xff]
    %v184 = vld [vmem:[%s2 + $0x28] sm:$0xff]
    %v185 = vld [vmem:[%s2 + $0x30] sm:$0xff]
    %v186 = vld [vmem:[%s2 + $0x38] sm:$0xff]
    %v187 = vlaneseq
    %v188 = vshrl.u32 %v187, 7
    %v189 = vsub.s32 1, %v188
    %v190 = vrot.slane %v47, %v189
    %v192 = vsel %vm154, %v178, 0
    %194 = vmatprep.subr.mxu0 0.0
    %195 = vmatpush1.msra.mxu0 %v179
    %196 = vmatprep.subr.mxu0 0.0
    %197 = vmatpush1.msra.mxu0 %v180
    %198 = vmatprep.subr.mxu0 0.0
    %199 = vmatpush1.msra.mxu0 %v181
    %200 = vmatprep.subr.mxu0 0.0
    %201 = vmatpush1.msra.mxu0 %v182
    %202 = vmatprep.subr.mxu0 0.0
    %203 = vmatpush1.msra.mxu0 %v183
    %204 = vmatprep.subr.mxu0 0.0
    %205 = vmatpush1.msra.mxu0 %v184
    %206 = vmatprep.subr.mxu0 0.0
    %207 = vmatpush1.msra.mxu0 %v185
    %208 = vmatprep.subr.mxu0 0.0
    %209 = vmatpush1.msra.mxu0 %v186
    %210 = vmatprep.subr.mxu0 0.0
    %211 = vmatpush1.msra.mxu0 0.0
    %212 = vmatprep.subr.mxu0 0.0
    %213 = vmatpush1.msra.mxu0 0.0
    %214 = vmatprep.subr.mxu0 0.0
    %215 = vmatpush1.msra.mxu0 0.0
    %216 = vmatprep.subr.mxu0 0.0
    %217 = vmatpush1.msra.mxu0 0.0
    %218 = vmatprep.subr.mxu0 0.0
    %219 = vmatpush1.msra.mxu0 0.0
    %220 = vmatprep.subr.mxu0 0.0
    %221 = vmatpush1.msra.mxu0 0.0
    %222 = vmatprep.subr.mxu0 0.0
    %223 = vmatpush1.msra.mxu0 0.0
    %224 = vmatprep.subr.mxu0 0.0
    %225 = vmatpush1.msra.mxu0 0.0
    %226 = vmatprep.subr.mxu0 0.0
    %227 = vmatpush1.msra.mxu0 0.0
    %228 = vmatprep.subr.mxu0 0.0
    %229 = vmatpush1.msra.mxu0 0.0
    %230 = vmatprep.subr.mxu0 0.0
    %231 = vmatpush1.msra.mxu0 0.0
    %232 = vmatprep.subr.mxu0 0.0
    %233 = vmatpush1.msra.mxu0 0.0
    %234 = vmatprep.subr.mxu0 0.0
    %235 = vmatpush1.msra.mxu0 0.0
    %236 = vmatprep.subr.mxu0 0.0
    %237 = vmatpush1.msra.mxu0 0.0
    %238 = vmatprep.subr.mxu0 0.0
    %239 = vmatpush1.msra.mxu0 0.0
    %240 = vmatprep.subr.mxu0 0.0
    %241 = vmatpush1.msra.mxu0 0.0
    %242 = vmatprep.subr.mxu0 0.0
    %243 = vmatpush1.msra.mxu0 0.0
    %244 = vmatprep.subr.mxu0 0.0
    %245 = vmatpush1.msra.mxu0 0.0
    %246 = vmatprep.subr.mxu0 0.0
    %247 = vmatpush1.msra.mxu0 0.0
    %248 = vmatprep.subr.mxu0 0.0
    %249 = vmatpush1.msra.mxu0 0.0
    %250 = vmatprep.subr.mxu0 0.0
    %251 = vmatpush1.msra.mxu0 0.0
    %252 = vmatprep.subr.mxu0 0.0
    %253 = vmatpush1.msra.mxu0 0.0
    %254 = vmatprep.subr.mxu0 0.0
    %255 = vmatpush1.msra.mxu0 0.0
    %256 = vmatprep.subr.mxu0 0.0
    %257 = vmatpush1.msra.mxu0 0.0
    %258 = vmatprep.mubr.f32.mxu0 0.0
    %259 = vmatmul.mubr.f32.gmra.mrb[0].mxu0 %v192
    %v260 = vpop.f32.mrb[0].mxu0
    %v261 = vadd.f32 %v190, %v260
    %v262 = vpop.f32.mrb[0].mxu0
    %263 = vdwg.mxu0
    %v264 = vmax.f32 %v261, 0.0
    %v265 = vsel %vm154, %v264, 0.0
    %v266 = vrot.slane %v265, 4
    %v267 = vadd.f32 %v265, %v266
    %v268 = vrot.slane %v267, 2
    %v269 = vadd.f32 %v267, %v268
    %v270 = vrot.slane %v269, 1
    %v271 = vadd.f32 %v269, %v270
    %v272 = vmul.f32 %v271, %v56
    %v273 = vmul.f32 %v264, %v264
    %v274 = vsel %vm154, %v273, 0.0
    %v275 = vrot.slane %v274, 4
    %v276 = vadd.f32 %v274, %v275
    %v277 = vrot.slane %v276, 2
    %v278 = vadd.f32 %v276, %v277
    %v279 = vrot.slane %v278, 1
    %v280 = vadd.f32 %v278, %v279
    %v281 = vmul.f32 %v280, %v56
    %v282 = vmul.f32 %v272, %v272
    %v283 = vsub.f32 %v281, %v282
    %v284 = vmax.f32 %v283, 0.0
    %v285 = vsub.f32 %v264, %v272
    %v286 = vadd.f32 %v284, 1e-05
    %v287 = vrsqrt.pop %v286
    %v288 = vmul.f32 %v285, %v287
    %v289 = vld [vmem:[%s3] sm:$0xff]
    %v290 = vld [vmem:[%s3 + $0x8] sm:$0xff]
    %v291 = vld [vmem:[%s3 + $0x10] sm:$0xff]
    %v292 = vld [vmem:[%s3 + $0x18] sm:$0xff]
    %v293 = vld [vmem:[%s3 + $0x20] sm:$0xff]
    %v294 = vld [vmem:[%s3 + $0x28] sm:$0xff]
    %v295 = vld [vmem:[%s3 + $0x30] sm:$0xff]
    %v296 = vld [vmem:[%s3 + $0x38] sm:$0xff]
    %v297 = vlaneseq
    %v298 = vshrl.u32 %v297, 7
    %v299 = vsub.s32 2, %v298
    %v300 = vrot.slane %v47, %v299
    %v302 = vsel %vm154, %v288, 0
    %304 = vmatprep.subr.mxu0 0.0
    %305 = vmatpush1.msra.mxu0 %v289
    %306 = vmatprep.subr.mxu0 0.0
    %307 = vmatpush1.msra.mxu0 %v290
    %308 = vmatprep.subr.mxu0 0.0
    %309 = vmatpush1.msra.mxu0 %v291
    %310 = vmatprep.subr.mxu0 0.0
    %311 = vmatpush1.msra.mxu0 %v292
    %312 = vmatprep.subr.mxu0 0.0
    %313 = vmatpush1.msra.mxu0 %v293
    %314 = vmatprep.subr.mxu0 0.0
    %315 = vmatpush1.msra.mxu0 %v294
    %316 = vmatprep.subr.mxu0 0.0
    %317 = vmatpush1.msra.mxu0 %v295
    %318 = vmatprep.subr.mxu0 0.0
    %319 = vmatpush1.msra.mxu0 %v296
    %320 = vmatprep.subr.mxu0 0.0
    %321 = vmatpush1.msra.mxu0 0.0
    %322 = vmatprep.subr.mxu0 0.0
    %323 = vmatpush1.msra.mxu0 0.0
    %324 = vmatprep.subr.mxu0 0.0
    %325 = vmatpush1.msra.mxu0 0.0
    %326 = vmatprep.subr.mxu0 0.0
    %327 = vmatpush1.msra.mxu0 0.0
    %328 = vmatprep.subr.mxu0 0.0
    %329 = vmatpush1.msra.mxu0 0.0
    %330 = vmatprep.subr.mxu0 0.0
    %331 = vmatpush1.msra.mxu0 0.0
    %332 = vmatprep.subr.mxu0 0.0
    %333 = vmatpush1.msra.mxu0 0.0
    %334 = vmatprep.subr.mxu0 0.0
    %335 = vmatpush1.msra.mxu0 0.0
    %336 = vmatprep.subr.mxu0 0.0
    %337 = vmatpush1.msra.mxu0 0.0
    %338 = vmatprep.subr.mxu0 0.0
    %339 = vmatpush1.msra.mxu0 0.0
    %340 = vmatprep.subr.mxu0 0.0
    %341 = vmatpush1.msra.mxu0 0.0
    %342 = vmatprep.subr.mxu0 0.0
    %343 = vmatpush1.msra.mxu0 0.0
    %344 = vmatprep.subr.mxu0 0.0
    %345 = vmatpush1.msra.mxu0 0.0
    %346 = vmatprep.subr.mxu0 0.0
    %347 = vmatpush1.msra.mxu0 0.0
    %348 = vmatprep.subr.mxu0 0.0
    %349 = vmatpush1.msra.mxu0 0.0
    %350 = vmatprep.subr.mxu0 0.0
    %351 = vmatpush1.msra.mxu0 0.0
    %352 = vmatprep.subr.mxu0 0.0
    %353 = vmatpush1.msra.mxu0 0.0
    %354 = vmatprep.subr.mxu0 0.0
    %355 = vmatpush1.msra.mxu0 0.0
    %356 = vmatprep.subr.mxu0 0.0
    %357 = vmatpush1.msra.mxu0 0.0
    %358 = vmatprep.subr.mxu0 0.0
    %359 = vmatpush1.msra.mxu0 0.0
    %360 = vmatprep.subr.mxu0 0.0
    %361 = vmatpush1.msra.mxu0 0.0
    %362 = vmatprep.subr.mxu0 0.0
    %363 = vmatpush1.msra.mxu0 0.0
    %364 = vmatprep.subr.mxu0 0.0
    %365 = vmatpush1.msra.mxu0 0.0
    %366 = vmatprep.subr.mxu0 0.0
    %367 = vmatpush1.msra.mxu0 0.0
    %368 = vmatprep.mubr.f32.mxu0 0.0
    %369 = vmatmul.mubr.f32.gmra.mrb[0].mxu0 %v302
    %v370 = vpop.f32.mrb[0].mxu0
    %v371 = vadd.f32 %v300, %v370
    %v372 = vpop.f32.mrb[0].mxu0
    %373 = vdwg.mxu0
    %v374 = vtanh.pop %v371
    %vm375 = vcmask 31744
    %376 = vst.msk [vmem:[%s5] sm:$0xff] %vm375, %v374
    // Predicated region
    $region30: #{actor_forward.1} parent=1 // pred_check
      _
    $region31: #{actor_forward.1} parent=1 // pred_check_branch
      %378 = sbr.rel (0) target = $region33
    $region32: #{actor_forward.1} parent=1 // pred_region
      _
    $region33: #{actor_forward.1} parent=1 // pred_fallthru
      _
    // Predicated region
    $region34: #{actor_forward.1} parent=1 // pred_check
      _
    $region35: #{actor_forward.1} parent=1 // pred_check_branch
      %380 = sbr.rel (0) target = $region37
    $region36: #{actor_forward.1} parent=1 // pred_region
      _
    $region37: #{actor_forward.1} parent=1 // pred_fallthru
      _
    %381 = vsyncpa [#allocation3], 1
    %382 = vsyncpa [#allocation5], 1

</llo_original>
